<compile_context>
chip_gen: v5e
topology: v5e:2x2
jax: 0.10.0
libtpu: 0.0.40
codegen_flags: <defaults>
</compile_context>

<pallas_src>
import functools

import jax
import jax.numpy as jnp
from jax.experimental import pallas as pl
from jax.experimental.pallas import tpu as pltpu


def double_conv_kernel(x_ref, w1_ref, b1_ref, w2_ref, b2_ref, o_ref,
                       p1_ref, h1_ref, p2_ref, *, img_w):
    # x_ref : (Cin, (H+1)*W)   bf16   flattened image, one zero pad row
    # w1_ref: (Cout, 9*Cin)    bf16   (pre-transposed, tap-major K)
    # b1_ref: (Cout, 1)        f32
    # w2_ref: (Cout, 9*Cout)   bf16
    # b2_ref: (Cout, 1)        f32
    # o_ref : (Cout, H2*W)     f32    lane-dense (garbage cols sliced off later)
    # p1_ref: (9*Cin,  H1*W)   bf16   VMEM scratch, K-major im2col (conv1)
    # h1_ref: (Cout, H1*W + W) bf16   VMEM scratch, conv1 activation (+ pad)
    # p2_ref: (9*Cout, H2*W)   bf16   VMEM scratch, K-major im2col (conv2)
    Cin = x_ref.shape[0]
    Cout = w1_ref.shape[0]
    M1 = p1_ref.shape[1]          # (H-2)*W
    M2 = p2_ref.shape[1]          # (H-4)*W
    pad = h1_ref.shape[1] - M1    # = W

    # ---- conv1: K-major im2col; each tap is a contiguous lane slice ----
    for kh in range(3):
        for kw in range(3):
            t = kh * 3 + kw
            off = kh * img_w + kw
            p1_ref[pl.ds(t * Cin, Cin), :] = x_ref[:, pl.ds(off, M1)]
    acc1 = jnp.dot(w1_ref[...], p1_ref[...],
                   preferred_element_type=jnp.float32)         # (Cout, M1) f32
    h1_ref[:, pl.ds(0, M1)] = jnp.maximum(acc1 + b1_ref[...],
                                          0.0).astype(jnp.bfloat16)
    # Zero the tap-overrun pad so conv2 never reads uninitialized VMEM.
    h1_ref[:, pl.ds(M1, pad)] = jnp.zeros((Cout, pad), jnp.bfloat16)

    # ---- conv2: taps read straight from the h1 VMEM scratch (lane offsets) ----
    for kh in range(3):
        for kw in range(3):
            t = kh * 3 + kw
            off = kh * img_w + kw
            p2_ref[pl.ds(t * Cout, Cout), :] = h1_ref[:, pl.ds(off, M2)]
    acc2 = jnp.dot(w2_ref[...], p2_ref[...],
                   preferred_element_type=jnp.float32)         # (Cout, M2) f32

    # Lane-dense direct store: (Cout, H2*W), no transpose epilogue.
    o_ref[...] = jnp.maximum(acc2 + b2_ref[...], 0.0)


def double_conv(x_nchw, w1, b1, w2, b2):
    """x_nchw: (N, Cin, H, W) f32; w: (3, 3, Cin, Cout). Returns (N, Cout, H-4, W-4) f32."""
    N, Cin, H, W = x_nchw.shape
    Cout = w1.shape[-1]
    H2, W2 = H - 4, W - 4
    M1 = (H - 2) * W          # conv1 flattened output length (incl. garbage cols)
    M2 = (H - 4) * W          # conv2 flattened output length (incl. garbage cols)
    HWp = (H + 1) * W         # padded flat length so bottom-row taps stay in bounds

    # NCHW is already pixels-on-lanes: flatten H*W onto the lane axis (free
    # reshape), cast to bf16 (halves the input DMA), pad one zero row.
    x_flat = x_nchw.reshape(N, Cin, H * W).astype(jnp.bfloat16)
    x_flat = jnp.pad(x_flat, ((0, 0), (0, 0), (0, HWp - H * W)))

    # Pre-transposed, im2col-flattened bf16 weights: rows = Cout, K tap-major.
    w1_t = w1.reshape(9 * Cin, Cout).T.astype(jnp.bfloat16)    # (Cout, 9*Cin)
    w2_t = w2.reshape(9 * Cout, Cout).T.astype(jnp.bfloat16)   # (Cout, 9*Cout)
    b1c = b1.reshape(Cout, 1).astype(jnp.float32)
    b2c = b2.reshape(Cout, 1).astype(jnp.float32)

    kernel = functools.partial(double_conv_kernel, img_w=W)

    out_flat = pl.pallas_call(
        kernel,
        out_shape=jax.ShapeDtypeStruct((N, Cout, M2), jnp.float32),
        grid_spec=pltpu.PrefetchScalarGridSpec(
            num_scalar_prefetch=0,
            grid=(N,),
            in_specs=[
                pl.BlockSpec((None, Cin, HWp), lambda n: (n, 0, 0)),
                pl.BlockSpec((Cout, 9 * Cin), lambda n: (0, 0)),
                pl.BlockSpec((Cout, 1), lambda n: (0, 0)),
                pl.BlockSpec((Cout, 9 * Cout), lambda n: (0, 0)),
                pl.BlockSpec((Cout, 1), lambda n: (0, 0)),
            ],
            out_specs=pl.BlockSpec((None, Cout, M2), lambda n: (n, 0, 0)),
            scratch_shapes=[
                pltpu.VMEM((9 * Cin, M1), jnp.bfloat16),    # conv1 im2col (bf16)
                pltpu.VMEM((Cout, M1 + W), jnp.bfloat16),   # h1 activation (bf16)
                pltpu.VMEM((9 * Cout, M2), jnp.bfloat16),   # conv2 im2col (bf16)
            ],
        ),
        compiler_params=pltpu.CompilerParams(
            dimension_semantics=("parallel",),
            vmem_limit_bytes=16 * 1024 * 1024,
        ),
    )(x_flat, w1_t, b1c, w2_t, b2c)

    # (N, Cout, H2*W) -> (N, Cout, H2, W) -> drop the W-W2 garbage columns.
    return out_flat.reshape(N, Cout, H2, W)[:, :, :, :W2]


def _reference(x_nchw, w1, b1, w2, b2, mxu_dtype=jnp.float32):
    """Pure-JAX reference (PyTorch NCHW/OIHW semantics). With mxu_dtype=bf16 it
    mirrors the kernel's bf16-operand / f32-accumulate matmuls."""
    w1_oihw = jnp.transpose(w1, (3, 2, 0, 1))
    w2_oihw = jnp.transpose(w2, (3, 2, 0, 1))
    dn = ('NCHW', 'OIHW', 'NCHW')
    y = jax.lax.conv_general_dilated(
        x_nchw.astype(mxu_dtype), w1_oihw.astype(mxu_dtype), (1, 1), 'VALID',
        dimension_numbers=dn, preferred_element_type=jnp.float32)
    y = jnp.maximum(y + b1[None, :, None, None], 0.0)
    y = jax.lax.conv_general_dilated(
        y.astype(mxu_dtype), w2_oihw.astype(mxu_dtype), (1, 1), 'VALID',
        dimension_numbers=dn, preferred_element_type=jnp.float32)
    y = jnp.maximum(y + b2[None, :, None, None], 0.0)
    return y


if __name__ == "__main__":
    # Small shapes consistent with the module: batch=2, in_ch=4, out_ch=8, spatial=16.
    N, IN_CH, OUT_CH, H, W = 2, 4, 8, 16, 16

    key = jax.random.PRNGKey(0)
    kx, kw1, kb1, kw2, kb2 = jax.random.split(key, 5)

    x = jax.random.normal(kx, (N, IN_CH, H, W), dtype=jnp.float32)

    # Deterministic fan-in-scaled parameter init (like PyTorch's default range).
    fan1 = IN_CH * 9
    fan2 = OUT_CH * 9
    w1 = jax.random.uniform(kw1, (3, 3, IN_CH, OUT_CH), jnp.float32,
                            -1.0 / jnp.sqrt(fan1), 1.0 / jnp.sqrt(fan1))
    b1 = jax.random.uniform(kb1, (OUT_CH,), jnp.float32,
                            -1.0 / jnp.sqrt(fan1), 1.0 / jnp.sqrt(fan1))
    w2 = jax.random.uniform(kw2, (3, 3, OUT_CH, OUT_CH), jnp.float32,
                            -1.0 / jnp.sqrt(fan2), 1.0 / jnp.sqrt(fan2))
    b2 = jax.random.uniform(kb2, (OUT_CH,), jnp.float32,
                            -1.0 / jnp.sqrt(fan2), 1.0 / jnp.sqrt(fan2))

    out = double_conv(x, w1, b1, w2, b2)
    out = jax.block_until_ready(out)
    assert out.shape == (N, OUT_CH, H - 4, W - 4), out.shape

    # Tight check vs a reference using the same bf16-operand / f32-accumulate math.
    ref_bf16 = jax.block_until_ready(_reference(x, w1, b1, w2, b2, jnp.bfloat16))
    assert jnp.allclose(out, ref_bf16, atol=2e-3, rtol=2e-3), \
        float(jnp.max(jnp.abs(out - ref_bf16)))

    # Sanity check vs the exact f32 PyTorch-semantics reference (bf16 rounding tol).
    ref_f32 = jax.block_until_ready(_reference(x, w1, b1, w2, b2, jnp.float32))
    assert jnp.allclose(out, ref_f32, atol=5e-2, rtol=5e-2), \
        float(jnp.max(jnp.abs(out - ref_f32)))

    print("KERNEL_OK")
</pallas_src>

<mosaic_0001>
module attributes {stable_mosaic.version = 11 : i64} {
  func.func @double_conv_kernel(%arg0: i32, %arg1: memref<1x4x272xbf16, #tpu.memory_space<vmem>>, %arg2: memref<8x36xbf16, #tpu.memory_space<vmem>>, %arg3: memref<8x1xf32, #tpu.memory_space<vmem>>, %arg4: memref<8x72xbf16, #tpu.memory_space<vmem>>, %arg5: memref<8x1xf32, #tpu.memory_space<vmem>>, %arg6: memref<1x8x192xf32, #tpu.memory_space<vmem>>, %arg7: memref<36x224xbf16, #tpu.memory_space<vmem>>, %arg8: memref<8x240xbf16, #tpu.memory_space<vmem>>, %arg9: memref<72x192xbf16, #tpu.memory_space<vmem>>) attributes {dimension_semantics = [#tpu.dimension_semantics<parallel>], iteration_bounds = array<i64: 2>, scalar_prefetch = 0 : i64, scratch_operands = 3 : i64, tpu.core_type = #tpu.core_type<tc>, window_params = [{transform_indices = @transform_0, window_bounds = array<i64: 1, 4, 272>}, {pipeline_mode = #tpu.pipeline_mode<synchronous>, transform_indices = @transform_1, window_bounds = array<i64: 8, 36>}, {pipeline_mode = #tpu.pipeline_mode<synchronous>, transform_indices = @transform_2, window_bounds = array<i64: 8, 1>}, {pipeline_mode = #tpu.pipeline_mode<synchronous>, transform_indices = @transform_3, window_bounds = array<i64: 8, 72>}, {pipeline_mode = #tpu.pipeline_mode<synchronous>, transform_indices = @transform_4, window_bounds = array<i64: 8, 1>}, {transform_indices = @transform_5, window_bounds = array<i64: 1, 8, 192>}]} {
    %c0 = arith.constant 0 : index
    %c0_0 = arith.constant 0 : index
    %c0_1 = arith.constant 0 : index
    %0 = vector.load %arg1[%c0, %c0_0, %c0_1] : memref<1x4x272xbf16, #tpu.memory_space<vmem>>, vector<1x4x224xbf16>
    %1 = vector.shape_cast %0 : vector<1x4x224xbf16> to vector<4x224xbf16>
    %c0_2 = arith.constant 0 : index
    %c0_3 = arith.constant 0 : index
    %2 = vector.load %arg7[%c0_2, %c0_3] : memref<36x224xbf16, #tpu.memory_space<vmem>>, vector<4x224xbf16>
    tpu.vector_store %arg7[%c0_2, %c0_3], %1 {strides = array<i32>} : memref<36x224xbf16, #tpu.memory_space<vmem>>, vector<4x224xbf16>,
    %c0_4 = arith.constant 0 : index
    %c0_5 = arith.constant 0 : index
    %c1 = arith.constant 1 : index
    %3 = vector.load %arg1[%c0_4, %c0_5, %c1] : memref<1x4x272xbf16, #tpu.memory_space<vmem>>, vector<1x4x224xbf16>
    %4 = vector.shape_cast %3 : vector<1x4x224xbf16> to vector<4x224xbf16>
    %c4 = arith.constant 4 : index
    %c0_6 = arith.constant 0 : index
    %5 = vector.load %arg7[%c4, %c0_6] : memref<36x224xbf16, #tpu.memory_space<vmem>>, vector<4x224xbf16>
    tpu.vector_store %arg7[%c4, %c0_6], %4 {strides = array<i32>} : memref<36x224xbf16, #tpu.memory_space<vmem>>, vector<4x224xbf16>,
    %c0_7 = arith.constant 0 : index
    %c0_8 = arith.constant 0 : index
    %c2 = arith.constant 2 : index
    %6 = vector.load %arg1[%c0_7, %c0_8, %c2] : memref<1x4x272xbf16, #tpu.memory_space<vmem>>, vector<1x4x224xbf16>
    %7 = vector.shape_cast %6 : vector<1x4x224xbf16> to vector<4x224xbf16>
    %c8 = arith.constant 8 : index
    %c0_9 = arith.constant 0 : index
    %8 = vector.load %arg7[%c8, %c0_9] : memref<36x224xbf16, #tpu.memory_space<vmem>>, vector<4x224xbf16>
    tpu.vector_store %arg7[%c8, %c0_9], %7 {strides = array<i32>} : memref<36x224xbf16, #tpu.memory_space<vmem>>, vector<4x224xbf16>,
    %c0_10 = arith.constant 0 : index
    %c0_11 = arith.constant 0 : index
    %c16 = arith.constant 16 : index
    %9 = vector.load %arg1[%c0_10, %c0_11, %c16] : memref<1x4x272xbf16, #tpu.memory_space<vmem>>, vector<1x4x224xbf16>
    %10 = vector.shape_cast %9 : vector<1x4x224xbf16> to vector<4x224xbf16>
    %c12 = arith.constant 12 : index
    %c0_12 = arith.constant 0 : index
    %11 = vector.load %arg7[%c12, %c0_12] : memref<36x224xbf16, #tpu.memory_space<vmem>>, vector<4x224xbf16>
    tpu.vector_store %arg7[%c12, %c0_12], %10 {strides = array<i32>} : memref<36x224xbf16, #tpu.memory_space<vmem>>, vector<4x224xbf16>,
    %c0_13 = arith.constant 0 : index
    %c0_14 = arith.constant 0 : index
    %c17 = arith.constant 17 : index
    %12 = vector.load %arg1[%c0_13, %c0_14, %c17] : memref<1x4x272xbf16, #tpu.memory_space<vmem>>, vector<1x4x224xbf16>
    %13 = vector.shape_cast %12 : vector<1x4x224xbf16> to vector<4x224xbf16>
    %c16_15 = arith.constant 16 : index
    %c0_16 = arith.constant 0 : index
    %14 = vector.load %arg7[%c16_15, %c0_16] : memref<36x224xbf16, #tpu.memory_space<vmem>>, vector<4x224xbf16>
    tpu.vector_store %arg7[%c16_15, %c0_16], %13 {strides = array<i32>} : memref<36x224xbf16, #tpu.memory_space<vmem>>, vector<4x224xbf16>,
    %c0_17 = arith.constant 0 : index
    %c0_18 = arith.constant 0 : index
    %c18 = arith.constant 18 : index
    %15 = vector.load %arg1[%c0_17, %c0_18, %c18] : memref<1x4x272xbf16, #tpu.memory_space<vmem>>, vector<1x4x224xbf16>
    %16 = vector.shape_cast %15 : vector<1x4x224xbf16> to vector<4x224xbf16>
    %c20 = arith.constant 20 : index
    %c0_19 = arith.constant 0 : index
    %17 = vector.load %arg7[%c20, %c0_19] : memref<36x224xbf16, #tpu.memory_space<vmem>>, vector<4x224xbf16>
    tpu.vector_store %arg7[%c20, %c0_19], %16 {strides = array<i32>} : memref<36x224xbf16, #tpu.memory_space<vmem>>, vector<4x224xbf16>,
    %c0_20 = arith.constant 0 : index
    %c0_21 = arith.constant 0 : index
    %c32 = arith.constant 32 : index
    %18 = vector.load %arg1[%c0_20, %c0_21, %c32] : memref<1x4x272xbf16, #tpu.memory_space<vmem>>, vector<1x4x224xbf16>
    %19 = vector.shape_cast %18 : vector<1x4x224xbf16> to vector<4x224xbf16>
    %c24 = arith.constant 24 : index
    %c0_22 = arith.constant 0 : index
    %20 = vector.load %arg7[%c24, %c0_22] : memref<36x224xbf16, #tpu.memory_space<vmem>>, vector<4x224xbf16>
    tpu.vector_store %arg7[%c24, %c0_22], %19 {strides = array<i32>} : memref<36x224xbf16, #tpu.memory_space<vmem>>, vector<4x224xbf16>,
    %c0_23 = arith.constant 0 : index
    %c0_24 = arith.constant 0 : index
    %c33 = arith.constant 33 : index
    %21 = vector.load %arg1[%c0_23, %c0_24, %c33] : memref<1x4x272xbf16, #tpu.memory_space<vmem>>, vector<1x4x224xbf16>
    %22 = vector.shape_cast %21 : vector<1x4x224xbf16> to vector<4x224xbf16>
    %c28 = arith.constant 28 : index
    %c0_25 = arith.constant 0 : index
    %23 = vector.load %arg7[%c28, %c0_25] : memref<36x224xbf16, #tpu.memory_space<vmem>>, vector<4x224xbf16>
    tpu.vector_store %arg7[%c28, %c0_25], %22 {strides = array<i32>} : memref<36x224xbf16, #tpu.memory_space<vmem>>, vector<4x224xbf16>,
    %c0_26 = arith.constant 0 : index
    %c0_27 = arith.constant 0 : index
    %c34 = arith.constant 34 : index
    %24 = vector.load %arg1[%c0_26, %c0_27, %c34] : memref<1x4x272xbf16, #tpu.memory_space<vmem>>, vector<1x4x224xbf16>
    %25 = vector.shape_cast %24 : vector<1x4x224xbf16> to vector<4x224xbf16>
    %c32_28 = arith.constant 32 : index
    %c0_29 = arith.constant 0 : index
    %26 = vector.load %arg7[%c32_28, %c0_29] : memref<36x224xbf16, #tpu.memory_space<vmem>>, vector<4x224xbf16>
    tpu.vector_store %arg7[%c32_28, %c0_29], %25 {strides = array<i32>} : memref<36x224xbf16, #tpu.memory_space<vmem>>, vector<4x224xbf16>,
    %c0_30 = arith.constant 0 : index
    %c0_31 = arith.constant 0 : index
    %27 = vector.load %arg2[%c0_30, %c0_31] : memref<8x36xbf16, #tpu.memory_space<vmem>>, vector<8x36xbf16>
    %c0_32 = arith.constant 0 : index
    %c0_33 = arith.constant 0 : index
    %28 = vector.load %arg7[%c0_32, %c0_33] : memref<36x224xbf16, #tpu.memory_space<vmem>>, vector<36x224xbf16>
    %cst = arith.constant dense<0.000000e+00> : vector<8x224xf32>
    %29 = tpu.matmul %27, %28, %cst {dimension_numbers = #tpu.dot_dimension_numbers<[1], [0], [0], [1], [0, 0, 1, 1], [], []>} : vector<8x36xbf16>, vector<36x224xbf16>, vector<8x224xf32> -> vector<8x224xf32>
    %c0_34 = arith.constant 0 : index
    %c0_35 = arith.constant 0 : index
    %30 = vector.load %arg3[%c0_34, %c0_35] : memref<8x1xf32, #tpu.memory_space<vmem>>, vector<8x1xf32>
    %31 = vector.broadcast %30 : vector<8x1xf32> to vector<8x224xf32>
    %32 = arith.addf %29, %31 : vector<8x224xf32>
    %cst_36 = arith.constant 0.000000e+00 : f32
    %33 = vector.broadcast %cst_36 : f32 to vector<8x224xf32>
    %34 = arith.maximumf %32, %33 : vector<8x224xf32>
    %35 = arith.truncf %34 : vector<8x224xf32> to vector<8x224xbf16>
    %c0_37 = arith.constant 0 : index
    %c0_38 = arith.constant 0 : index
    %36 = vector.load %arg8[%c0_37, %c0_38] : memref<8x240xbf16, #tpu.memory_space<vmem>>, vector<8x224xbf16>
    tpu.vector_store %arg8[%c0_37, %c0_38], %35 {strides = array<i32>} : memref<8x240xbf16, #tpu.memory_space<vmem>>, vector<8x224xbf16>,
    %cst_39 = arith.constant 0.000000e+00 : bf16
    %37 = vector.broadcast %cst_39 : bf16 to vector<8x16xbf16>
    %c0_40 = arith.constant 0 : index
    %c224 = arith.constant 224 : index
    %38 = vector.load %arg8[%c0_40, %c224] : memref<8x240xbf16, #tpu.memory_space<vmem>>, vector<8x16xbf16>
    tpu.vector_store %arg8[%c0_40, %c224], %37 {strides = array<i32>} : memref<8x240xbf16, #tpu.memory_space<vmem>>, vector<8x16xbf16>,
    %c0_41 = arith.constant 0 : index
    %c0_42 = arith.constant 0 : index
    %39 = vector.load %arg8[%c0_41, %c0_42] : memref<8x240xbf16, #tpu.memory_space<vmem>>, vector<8x192xbf16>
    %c0_43 = arith.constant 0 : index
    %c0_44 = arith.constant 0 : index
    %40 = vector.load %arg9[%c0_43, %c0_44] : memref<72x192xbf16, #tpu.memory_space<vmem>>, vector<8x192xbf16>
    tpu.vector_store %arg9[%c0_43, %c0_44], %39 {strides = array<i32>} : memref<72x192xbf16, #tpu.memory_space<vmem>>, vector<8x192xbf16>,
    %c0_45 = arith.constant 0 : index
    %c1_46 = arith.constant 1 : index
    %41 = vector.load %arg8[%c0_45, %c1_46] : memref<8x240xbf16, #tpu.memory_space<vmem>>, vector<8x192xbf16>
    %c8_47 = arith.constant 8 : index
    %c0_48 = arith.constant 0 : index
    %42 = vector.load %arg9[%c8_47, %c0_48] : memref<72x192xbf16, #tpu.memory_space<vmem>>, vector<8x192xbf16>
    tpu.vector_store %arg9[%c8_47, %c0_48], %41 {strides = array<i32>} : memref<72x192xbf16, #tpu.memory_space<vmem>>, vector<8x192xbf16>,
    %c0_49 = arith.constant 0 : index
    %c2_50 = arith.constant 2 : index
    %43 = vector.load %arg8[%c0_49, %c2_50] : memref<8x240xbf16, #tpu.memory_space<vmem>>, vector<8x192xbf16>
    %c16_51 = arith.constant 16 : index
    %c0_52 = arith.constant 0 : index
    %44 = vector.load %arg9[%c16_51, %c0_52] : memref<72x192xbf16, #tpu.memory_space<vmem>>, vector<8x192xbf16>
    tpu.vector_store %arg9[%c16_51, %c0_52], %43 {strides = array<i32>} : memref<72x192xbf16, #tpu.memory_space<vmem>>, vector<8x192xbf16>,
    %c0_53 = arith.constant 0 : index
    %c16_54 = arith.constant 16 : index
    %45 = vector.load %arg8[%c0_53, %c16_54] : memref<8x240xbf16, #tpu.memory_space<vmem>>, vector<8x192xbf16>
    %c24_55 = arith.constant 24 : index
    %c0_56 = arith.constant 0 : index
    %46 = vector.load %arg9[%c24_55, %c0_56] : memref<72x192xbf16, #tpu.memory_space<vmem>>, vector<8x192xbf16>
    tpu.vector_store %arg9[%c24_55, %c0_56], %45 {strides = array<i32>} : memref<72x192xbf16, #tpu.memory_space<vmem>>, vector<8x192xbf16>,
    %c0_57 = arith.constant 0 : index
    %c17_58 = arith.constant 17 : index
    %47 = vector.load %arg8[%c0_57, %c17_58] : memref<8x240xbf16, #tpu.memory_space<vmem>>, vector<8x192xbf16>
    %c32_59 = arith.constant 32 : index
    %c0_60 = arith.constant 0 : index
    %48 = vector.load %arg9[%c32_59, %c0_60] : memref<72x192xbf16, #tpu.memory_space<vmem>>, vector<8x192xbf16>
    tpu.vector_store %arg9[%c32_59, %c0_60], %47 {strides = array<i32>} : memref<72x192xbf16, #tpu.memory_space<vmem>>, vector<8x192xbf16>,
    %c0_61 = arith.constant 0 : index
    %c18_62 = arith.constant 18 : index
    %49 = vector.load %arg8[%c0_61, %c18_62] : memref<8x240xbf16, #tpu.memory_space<vmem>>, vector<8x192xbf16>
    %c40 = arith.constant 40 : index
    %c0_63 = arith.constant 0 : index
    %50 = vector.load %arg9[%c40, %c0_63] : memref<72x192xbf16, #tpu.memory_space<vmem>>, vector<8x192xbf16>
    tpu.vector_store %arg9[%c40, %c0_63], %49 {strides = array<i32>} : memref<72x192xbf16, #tpu.memory_space<vmem>>, vector<8x192xbf16>,
    %c0_64 = arith.constant 0 : index
    %c32_65 = arith.constant 32 : index
    %51 = vector.load %arg8[%c0_64, %c32_65] : memref<8x240xbf16, #tpu.memory_space<vmem>>, vector<8x192xbf16>
    %c48 = arith.constant 48 : index
    %c0_66 = arith.constant 0 : index
    %52 = vector.load %arg9[%c48, %c0_66] : memref<72x192xbf16, #tpu.memory_space<vmem>>, vector<8x192xbf16>
    tpu.vector_store %arg9[%c48, %c0_66], %51 {strides = array<i32>} : memref<72x192xbf16, #tpu.memory_space<vmem>>, vector<8x192xbf16>,
    %c0_67 = arith.constant 0 : index
    %c33_68 = arith.constant 33 : index
    %53 = vector.load %arg8[%c0_67, %c33_68] : memref<8x240xbf16, #tpu.memory_space<vmem>>, vector<8x192xbf16>
    %c56 = arith.constant 56 : index
    %c0_69 = arith.constant 0 : index
    %54 = vector.load %arg9[%c56, %c0_69] : memref<72x192xbf16, #tpu.memory_space<vmem>>, vector<8x192xbf16>
    tpu.vector_store %arg9[%c56, %c0_69], %53 {strides = array<i32>} : memref<72x192xbf16, #tpu.memory_space<vmem>>, vector<8x192xbf16>,
    %c0_70 = arith.constant 0 : index
    %c34_71 = arith.constant 34 : index
    %55 = vector.load %arg8[%c0_70, %c34_71] : memref<8x240xbf16, #tpu.memory_space<vmem>>, vector<8x192xbf16>
    %c64 = arith.constant 64 : index
    %c0_72 = arith.constant 0 : index
    %56 = vector.load %arg9[%c64, %c0_72] : memref<72x192xbf16, #tpu.memory_space<vmem>>, vector<8x192xbf16>
    tpu.vector_store %arg9[%c64, %c0_72], %55 {strides = array<i32>} : memref<72x192xbf16, #tpu.memory_space<vmem>>, vector<8x192xbf16>,
    %c0_73 = arith.constant 0 : index
    %c0_74 = arith.constant 0 : index
    %57 = vector.load %arg4[%c0_73, %c0_74] : memref<8x72xbf16, #tpu.memory_space<vmem>>, vector<8x72xbf16>
    %c0_75 = arith.constant 0 : index
    %c0_76 = arith.constant 0 : index
    %58 = vector.load %arg9[%c0_75, %c0_76] : memref<72x192xbf16, #tpu.memory_space<vmem>>, vector<72x192xbf16>
    %cst_77 = arith.constant dense<0.000000e+00> : vector<8x192xf32>
    %59 = tpu.matmul %57, %58, %cst_77 {dimension_numbers = #tpu.dot_dimension_numbers<[1], [0], [0], [1], [0, 0, 1, 1], [], []>} : vector<8x72xbf16>, vector<72x192xbf16>, vector<8x192xf32> -> vector<8x192xf32>
    %c0_78 = arith.constant 0 : index
    %c0_79 = arith.constant 0 : index
    %60 = vector.load %arg5[%c0_78, %c0_79] : memref<8x1xf32, #tpu.memory_space<vmem>>, vector<8x1xf32>
    %61 = vector.broadcast %60 : vector<8x1xf32> to vector<8x192xf32>
    %62 = arith.addf %59, %61 : vector<8x192xf32>
    %cst_80 = arith.constant 0.000000e+00 : f32
    %63 = vector.broadcast %cst_80 : f32 to vector<8x192xf32>
    %64 = arith.maximumf %62, %63 : vector<8x192xf32>
    %c0_81 = arith.constant 0 : index
    %c0_82 = arith.constant 0 : index
    %c0_83 = arith.constant 0 : index
    %65 = vector.load %arg6[%c0_81, %c0_82, %c0_83] : memref<1x8x192xf32, #tpu.memory_space<vmem>>, vector<1x8x192xf32>
    %66 = vector.shape_cast %65 : vector<1x8x192xf32> to vector<8x192xf32>
    %67 = vector.shape_cast %64 : vector<8x192xf32> to vector<1x8x192xf32>
    tpu.vector_store %arg6[%c0_81, %c0_82, %c0_83], %67 {strides = array<i32>} : memref<1x8x192xf32, #tpu.memory_space<vmem>>, vector<1x8x192xf32>,
    return
  }
  func.func @transform_0(%arg0: i32) -> (i32, i32, i32) {
    %c0_i32 = arith.constant 0 : i32
    %c0_i32_0 = arith.constant 0 : i32
    %c0_i32_1 = arith.constant 0 : i32
    return %arg0, %c0_i32, %c0_i32_0 : i32, i32, i32
  }
  func.func @transform_1(%arg0: i32) -> (i32, i32) {
    %c0_i32 = arith.constant 0 : i32
    %c0_i32_0 = arith.constant 0 : i32
    %c0_i32_1 = arith.constant 0 : i32
    return %c0_i32, %c0_i32_0 : i32, i32
  }
  func.func @transform_2(%arg0: i32) -> (i32, i32) {
    %c0_i32 = arith.constant 0 : i32
    %c0_i32_0 = arith.constant 0 : i32
    %c0_i32_1 = arith.constant 0 : i32
    return %c0_i32, %c0_i32_0 : i32, i32
  }
  func.func @transform_3(%arg0: i32) -> (i32, i32) {
    %c0_i32 = arith.constant 0 : i32
    %c0_i32_0 = arith.constant 0 : i32
    %c0_i32_1 = arith.constant 0 : i32
    return %c0_i32, %c0_i32_0 : i32, i32
  }
  func.func @transform_4(%arg0: i32) -> (i32, i32) {
    %c0_i32 = arith.constant 0 : i32
    %c0_i32_0 = arith.constant 0 : i32
    %c0_i32_1 = arith.constant 0 : i32
    return %c0_i32, %c0_i32_0 : i32, i32
  }
  func.func @transform_5(%arg0: i32) -> (i32, i32, i32) {
    %c0_i32 = arith.constant 0 : i32
    %c0_i32_0 = arith.constant 0 : i32
    %c0_i32_1 = arith.constant 0 : i32
    return %arg0, %c0_i32, %c0_i32_0 : i32, i32, i32
  }
}

</mosaic_0001>

<llo_original>
// kernel: tpu_custom_call.1
$region0: #{tpu_custom_call.1}
  #allocation0 [shape = 'u32[]', space=smem, size = 0x4, offset = 0x4, fixed_abs, tag = 'smem constant byte address 0x4 - core index']
  #allocation1 [shape = 'u32[72,128]{1,0:T(1,128)}', space=vmem, size = 0x9000, scoped, tag = 'internal scratch']
  #allocation2 [shape = 'bf16[36,224]{1,0:T(8,128)(2,1)}', space=vmem, size = 0x5000, scoped, tag = 'scratch operand']
  #allocation3 [shape = 'bf16[8,240]{1,0:T(8,128)(2,1)}', space=vmem, size = 0x1000, scoped, tag = 'scratch operand']
  #allocation4 [shape = 'bf16[72,192]{1,0:T(8,128)(2,1)}', space=vmem, size = 0x9000, scoped, tag = 'scratch operand']
  %s0 = inlined_call_operand.vmem [shape: bf16[2,4,272], index: 0, kind: input, shape index: {}]
  %s1 = inlined_call_operand.vmem [shape: bf16[8,36], index: 1, kind: input, shape index: {}]
  %s2 = inlined_call_operand.vmem [shape: f32[8,1], index: 2, kind: input, shape index: {}]
  %s3 = inlined_call_operand.hbm [shape: bf16[8,72], index: 3, kind: input, shape index: {}]
  %s4 = inlined_call_operand.vmem [shape: f32[8,1], index: 4, kind: input, shape index: {}]
  %s5 = inlined_call_operand.hbm [shape: f32[2,8,192], index: 5, kind: output, shape index: {}]
  %s6 = sld [smem:[#allocation0]]
  $region57: #{tpu_custom_call.1} parent=0
    _
  %s8 = ssub.s32 1, %s6
  %s9 = scalar_select 0, %s8, %s6
  $region1: #{tpu_custom_call.1} parent=0
    #allocation5 [shape = 'u8[2048]{0}', space=vmem, size = 0x800, scoped, tag = 'input window, operand 3, single buffered']
    #allocation6 [shape = 's32[2]{0}', space=sflag, size = 0x8, scoped, tag = 'scoped memory for tpu_custom_call.1']
    #allocation7 [shape = 's32[2]{0}', space=sflag, size = 0x8, scoped, tag = 'scoped memory for tpu_custom_call.1']
    #allocation8 [shape = 'u8[16384]{0}', space=vmem, size = 0x4000, scoped, tag = 'output window, operand 0']
    %10 = vsyncpa [#allocation6], 0
    %11 = vsyncpa [#allocation7], 0
    %s12 = scalar_lea.sflag [#allocation7], 1
    %13 = vsyncpa %s12, 0
    loop: start=0, step=1, limit=4
    $region2: #{tpu_custom_call.1} parent=1 // loop_pre_header
      _
    $region3: #{tpu_custom_call.1} parent=1 // loop_header
      %s15 = sphi 0, %s19
      %p16 = scmp.ge.s32.totalorder %s15, 4
      %s25 = sphi 0, %s27
      %s28 = sphi 0, %s25
      %s29 = sphi 0, %s28
      %s45 = sphi 0, %s29
      %s49 = sphi 0, %s49
      %s51 = sphi 0, %s49
      %s52 = sphi 0, %s51
      %s66 = sphi 0, %s52
      %s70 = sphi 0, %s70
      %s72 = sphi 0, %s70
      %s73 = sphi 0, %s72
      %s87 = sphi 0, %s73
      %s91 = sphi 0, %s91
      %s93 = sphi 0, %s91
      %s94 = sphi 0, %s93
      %s108 = sphi 0, %s94
      %s112 = sphi 0, %s112
      %s114 = sphi 0, %s112
      %s115 = sphi 0, %s114
      %s129 = sphi 0, %s115
      %s135 = sphi 0, %s137
      %s138 = sphi 0, %s135
      %s139 = sphi 0, %s138
      %s155 = sphi 0, %s139
    $region4: #{tpu_custom_call.1} parent=1 // loop_header_branch
      %18 = sbr.rel (%p16) target = $region8
    $region5: #{tpu_custom_call.1} parent=1 // loop_body
      %s20 = ssub.s32 %s15, 1
      %s21 = ssub.s32 %s15, 2
      %s22 = sadd.s32 %s15, 1
      %s23 = ssub.s32 %s15, %s22
      %p24 = scmp.eq.s32.totalorder %s23, 0
      %s26 = sadd.s32 %s25, 1
      %s27 = scalar_select %p24, %s25, %s26
      %p30 = pneg %p24
      %p31 = scmp.eq.s32.totalorder %s15, 1
      %p32 = por %p30, %p31
      %p33 = scmp.ne.s32.totalorder %s25, %s28
      %p34 = scmp.eq.s32.totalorder %s15, 0
      %p35 = por %p33, %p34
      %p36 = scmp.ne.s32.totalorder %s25, %s28
      %p37 = scmp.eq.s32.totalorder %s20, 1
      %p38 = por %p36, %p37
      %p39 = scmp.ne.s32.totalorder %s28, %s29
      %p40 = scmp.eq.s32.totalorder %s20, 0
      %p41 = por %p39, %p40
      %p42 = scmp.ne.s32.totalorder %s28, %s29
      %p43 = scmp.eq.s32.totalorder %s21, 1
      %p44 = por %p42, %p43
      %p46 = scmp.ne.s32.totalorder %s29, %s45
      %p47 = scmp.eq.s32.totalorder %s21, 0
      %p48 = por %p46, %p47
      %s50 = sadd.s32 %s49, 1
      %p53 = scmp.eq.s32.totalorder %s15, 1
      %p54 = scmp.ne.s32.totalorder %s49, %s51
      %p55 = scmp.eq.s32.totalorder %s15, 0
      %p56 = por %p54, %p55
      %p57 = scmp.ne.s32.totalorder %s49, %s51
      %p58 = scmp.eq.s32.totalorder %s20, 1
      %p59 = por %p57, %p58
      %p60 = scmp.ne.s32.totalorder %s51, %s52
      %p61 = scmp.eq.s32.totalorder %s20, 0
      %p62 = por %p60, %p61
      %p63 = scmp.ne.s32.totalorder %s51, %s52
      %p64 = scmp.eq.s32.totalorder %s21, 1
      %p65 = por %p63, %p64
      %p67 = scmp.ne.s32.totalorder %s52, %s66
      %p68 = scmp.eq.s32.totalorder %s21, 0
      %p69 = por %p67, %p68
      %s71 = sadd.s32 %s70, 1
      %p74 = scmp.eq.s32.totalorder %s15, 1
      %p75 = scmp.ne.s32.totalorder %s70, %s72
      %p76 = scmp.eq.s32.totalorder %s15, 0
      %p77 = por %p75, %p76
      %p78 = scmp.ne.s32.totalorder %s70, %s72
      %p79 = scmp.eq.s32.totalorder %s20, 1
      %p80 = por %p78, %p79
      %p81 = scmp.ne.s32.totalorder %s72, %s73
      %p82 = scmp.eq.s32.totalorder %s20, 0
      %p83 = por %p81, %p82
      %p84 = scmp.ne.s32.totalorder %s72, %s73
      %p85 = scmp.eq.s32.totalorder %s21, 1
      %p86 = por %p84, %p85
      %p88 = scmp.ne.s32.totalorder %s73, %s87
      %p89 = scmp.eq.s32.totalorder %s21, 0
      %p90 = por %p88, %p89
      %s92 = sadd.s32 %s91, 1
      %p95 = scmp.eq.s32.totalorder %s15, 1
      %p96 = scmp.ne.s32.totalorder %s91, %s93
      %p97 = scmp.eq.s32.totalorder %s15, 0
      %p98 = por %p96, %p97
      %p99 = scmp.ne.s32.totalorder %s91, %s93
      %p100 = scmp.eq.s32.totalorder %s20, 1
      %p101 = por %p99, %p100
      %p102 = scmp.ne.s32.totalorder %s93, %s94
      %p103 = scmp.eq.s32.totalorder %s20, 0
      %p104 = por %p102, %p103
      %p105 = scmp.ne.s32.totalorder %s93, %s94
      %p106 = scmp.eq.s32.totalorder %s21, 1
      %p107 = por %p105, %p106
      %p109 = scmp.ne.s32.totalorder %s94, %s108
      %p110 = scmp.eq.s32.totalorder %s21, 0
      %p111 = por %p109, %p110
      %s113 = sadd.s32 %s112, 1
      %p116 = scmp.eq.s32.totalorder %s15, 1
      %p117 = scmp.ne.s32.totalorder %s112, %s114
      %p118 = scmp.eq.s32.totalorder %s15, 0
      %p119 = por %p117, %p118
      %p120 = scmp.ne.s32.totalorder %s112, %s114
      %p121 = scmp.eq.s32.totalorder %s20, 1
      %p122 = por %p120, %p121
      %p123 = scmp.ne.s32.totalorder %s114, %s115
      %p124 = scmp.eq.s32.totalorder %s20, 0
      %p125 = por %p123, %p124
      %p126 = scmp.ne.s32.totalorder %s114, %s115
      %p127 = scmp.eq.s32.totalorder %s21, 1
      %p128 = por %p126, %p127
      %p130 = scmp.ne.s32.totalorder %s115, %s129
      %p131 = scmp.eq.s32.totalorder %s21, 0
      %p132 = por %p130, %p131
      %s133 = ssub.s32 %s15, %s22
      %p134 = scmp.eq.s32.totalorder %s133, 0
      %s136 = sadd.s32 %s135, 1
      %s137 = scalar_select %p134, %s135, %s136
      %p140 = pneg %p134
      %p141 = scmp.eq.s32.totalorder %s15, 1
      %p142 = por %p140, %p141
      %p143 = scmp.ne.s32.totalorder %s135, %s138
      %p144 = scmp.eq.s32.totalorder %s15, 0
      %p145 = por %p143, %p144
      %p146 = scmp.ne.s32.totalorder %s135, %s138
      %p147 = scmp.eq.s32.totalorder %s20, 1
      %p148 = por %p146, %p147
      %p149 = scmp.ne.s32.totalorder %s138, %s139
      %p150 = scmp.eq.s32.totalorder %s20, 0
      %p151 = por %p149, %p150
      %p152 = scmp.ne.s32.totalorder %s138, %s139
      %p153 = scmp.eq.s32.totalorder %s21, 1
      %p154 = por %p152, %p153
      %p156 = scmp.ne.s32.totalorder %s139, %s155
      %p157 = scmp.eq.s32.totalorder %s21, 0
      %p158 = por %p156, %p157
      %p159 = scmp.le.s32.totalorder 1, %s15
      %p160 = scmp.lt.s32.totalorder %s15, 3
      %p161 = pnand %p159, %p160
      %p162 = pneg %p161
      // Predicated region
      $region9: #{tpu_custom_call.1} parent=5 // pred_check
        _
      $region10: #{tpu_custom_call.1} parent=5 // pred_check_branch
        %164 = sbr.rel (%p161) target = $region12
      $region11: #{tpu_custom_call.1} parent=5 // pred_region
        %s165 = ssub.s32 %s15, 1
        // Predicated region
        $region13: #{tpu_custom_call.1} parent=11 // pred_check
          %p166 = pneg %p62
        $region14: #{tpu_custom_call.1} parent=11 // pred_check_branch
          %168 = sbr.rel (%p166) target = $region16
        $region15: #{tpu_custom_call.1} parent=11 // pred_region
          _
        $region16: #{tpu_custom_call.1} parent=11 // pred_fallthru
          _
        // Predicated region
        $region17: #{tpu_custom_call.1} parent=11 // pred_check
          %p169 = pneg %p83
        $region18: #{tpu_custom_call.1} parent=11 // pred_check_branch
          %171 = sbr.rel (%p169) target = $region20
        $region19: #{tpu_custom_call.1} parent=11 // pred_region
          _
        $region20: #{tpu_custom_call.1} parent=11 // pred_fallthru
          _
        // Predicated region
        $region21: #{tpu_custom_call.1} parent=11 // pred_check
          %p172 = pneg %p104
        $region22: #{tpu_custom_call.1} parent=11 // pred_check_branch
          %174 = sbr.rel (%p172) target = $region24
        $region23: #{tpu_custom_call.1} parent=11 // pred_region
          %176 = vsyncadd [#allocation6], 0
          %s178 = sshll.u32 %s3, 4
          %s179 = int_to_ptr.hbm [resolvable:$true] %s178
          %s180 = sshll.u32 [#allocation5], 4
          %s181 = int_to_ptr.vmem [resolvable:$true] %s180
          %183 = dma.hbm_to_vmem [thread:$0]  %s179, 64, %s181, [#allocation6]
        $region24: #{tpu_custom_call.1} parent=11 // pred_fallthru
          _
        // Predicated region
        $region25: #{tpu_custom_call.1} parent=11 // pred_check
          %p184 = pneg %p125
        $region26: #{tpu_custom_call.1} parent=11 // pred_check_branch
          %186 = sbr.rel (%p184) target = $region28
        $region27: #{tpu_custom_call.1} parent=11 // pred_region
          _
        $region28: #{tpu_custom_call.1} parent=11 // pred_fallthru
          _
      $region12: #{tpu_custom_call.1} parent=5 // pred_fallthru
        _
      %p187 = scmp.lt.s32.totalorder %s15, 2
      // Predicated region
      $region29: #{tpu_custom_call.1} parent=5 // pred_check
        %p188 = pneg %p187
      $region30: #{tpu_custom_call.1} parent=5 // pred_check_branch
        %190 = sbr.rel (%p188) target = $region32
      $region31: #{tpu_custom_call.1} parent=5 // pred_region
        // Predicated region
        $region33: #{tpu_custom_call.1} parent=31 // pred_check
          %p191 = pneg %p35
        $region34: #{tpu_custom_call.1} parent=31 // pred_check_branch
          %193 = sbr.rel (%p191) target = $region36
        $region35: #{tpu_custom_call.1} parent=31 // pred_region
          %p194 = scmp.lt.s32.totalorder %s15, 1
          %s195 = scalar_select %p194, %s15, 1
          %s196 = smul.addr %s195, 3
          %s197 = smul.addr %s196, 2
          %s198 = scalar_lea.vmem %s0, %s197
        $region36: #{tpu_custom_call.1} parent=31 // pred_fallthru
          _
      $region32: #{tpu_custom_call.1} parent=5 // pred_fallthru
        _
      %p199 = scmp.le.s32.totalorder 1, %s15
      %p200 = scmp.lt.s32.totalorder %s15, 3
      %p201 = pnand %p199, %p200
      %p202 = pneg %p201
      // Predicated region
      $region37: #{tpu_custom_call.1} parent=5 // pred_check
        _
      $region38: #{tpu_custom_call.1} parent=5 // pred_check_branch
        %204 = sbr.rel (%p201) target = $region40
      $region39: #{tpu_custom_call.1} parent=5 // pred_region
        %s205 = ssub.s32 %s15, 1
        // Predicated region
        $region41: #{tpu_custom_call.1} parent=39 // pred_check
          %p206 = pneg %p104
        $region42: #{tpu_custom_call.1} parent=39 // pred_check_branch
          %208 = sbr.rel (%p206) target = $region44
        $region43: #{tpu_custom_call.1} parent=39 // pred_region
          %210 = dma.done [#allocation6], 64
        $region44: #{tpu_custom_call.1} parent=39 // pred_fallthru
          _
        %p211 = scmp.lt.s32.totalorder %s20, 1
        %s212 = scalar_select %p211, %s20, 1
        %s213 = smul.addr %s212, 3
        %s214 = smul.addr %s213, 2
        %s215 = scalar_lea.vmem %s0, %s214
        %p216 = pneg %p41
        %p217 = pneg %p38
        %p218 = pneg %p62
        %p219 = pneg %p59
        %p220 = pneg %p83
        %p221 = pneg %p80
        %p222 = pneg %p104
        %p223 = pneg %p101
        %p224 = pneg %p125
        %p225 = pneg %p122
        %p226 = pneg %p151
        %p227 = pneg %p148
        %s228 = sand.u32 %s138, 1
        %s229 = scalar_lea.sflag [#allocation7], %s228
        %s230 = sand.u32 %s138, 1
        %s231 = smul.addr %s230, 16
        %s232 = scalar_lea.vmem [#allocation8], %s231
        %p233 = scmp.lt.s32.totalorder %s20, 1
        %s234 = scalar_select %p233, %s20, 1
        %s235 = smul.addr %s234, 3
        %s236 = smul.addr %s235, 2
        %s237 = scalar_lea.vmem %s0, %s236
        %v239 = vld [vmem:[%s237] sm:$0xf]
        %241 = vst [vmem:[#allocation1] ss:$2 sm:$0xff] %v239
        %v242 = vld.sshfl [vmem:[#allocation1] sm:$0xff pattern:$0x75643120]
        %vm244 = vcmask 1041408
        %vm245 = vcmask 783364
        %vm246 = vmor %vm245, %vm244
        %247 = vst.msk [vmem:[#allocation2] sm:$0x33] %vm246, %v242
        %v248 = vld [vmem:[%s237] sm:$0xf]
        %s250 = scalar_lea.vmem [#allocation1], 1
        %251 = vst [vmem:[%s250] ss:$2 sm:$0xff] %v248
        %v252 = vld.sshfl [vmem:[#allocation1] sm:$0xff pattern:$0x75643120]
        %254 = vrot.lane.b32.xlu0 %v252, 127
        %v255 = vpop.permute.xlu0 %254
        %v256 = vrot.slane %v255, 4
        %vm257 = vcmask 1039360
        %v258 = vsel %vm257, %v255, %v256
        %vm260 = vcmask 1043458
        %vm261 = vcmask 785414
        %vm262 = vmor %vm261, %vm260
        %263 = vst.msk [vmem:[#allocation2] sm:$0xcc] %vm262, %v258
        %v264 = vld [vmem:[%s237] sm:$0xf]
        %266 = vst [vmem:[#allocation1] ss:$2 sm:$0xff] %v264
        %v267 = vld.sshfl [vmem:[#allocation1] sm:$0xff pattern:$0x75643120]
        %269 = vrot.lane.b32.xlu0 %v267, 126
        %v270 = vpop.permute.xlu0 %269
        %v271 = vrot.slane %v270, 4
        %vm272 = vcmask 1031168
        %v273 = vsel %vm272, %v270, %v271
        %275 = vst.msk [vmem:[#allocation2 + $0x8] sm:$0x33] %vm246, %v273
        %v276 = vld [vmem:[%s237] sm:$0xf]
        %s278 = scalar_lea.vmem [#allocation1], 1
        %279 = vst [vmem:[%s278] ss:$2 sm:$0xff] %v276
        %v280 = vld.sshfl [vmem:[#allocation1] sm:$0xff pattern:$0x75643120]
        %282 = vrot.lane.b32.xlu0 %v280, 112
        %v283 = vpop.permute.xlu0 %282
        %v284 = vrot.slane %v283, 4
        %vm285 = vcmask 916480
        %v286 = vsel %vm285, %v283, %v284
        %288 = vst.msk [vmem:[#allocation2 + $0x8] sm:$0xcc] %vm262, %v286
        %v289 = vld [vmem:[%s237] sm:$0xf]
        %291 = vst [vmem:[#allocation1] ss:$2 sm:$0xff] %v289
        %v292 = vld.sshfl [vmem:[#allocation1] sm:$0xff pattern:$0x75643120]
        %294 = vrot.lane.b32.xlu0 %v292, 111
        %v295 = vpop.permute.xlu0 %294
        %v296 = vrot.slane %v295, 4
        %vm297 = vcmask 908288
        %v298 = vsel %vm297, %v295, %v296
        %300 = vst.msk [vmem:[#allocation2 + $0x10] sm:$0x33] %vm246, %v298
        %v301 = vld [vmem:[%s237] sm:$0xf]
        %s303 = scalar_lea.vmem [#allocation1], 1
        %304 = vst [vmem:[%s303] ss:$2 sm:$0xff] %v301
        %v305 = vld.sshfl [vmem:[#allocation1] sm:$0xff pattern:$0x75643120]
        %307 = vrot.lane.b32.xlu0 %v305, 110
        %v308 = vpop.permute.xlu0 %307
        %v309 = vrot.slane %v308, 4
        %vm310 = vcmask 900096
        %v311 = vsel %vm310, %v308, %v309
        %313 = vst.msk [vmem:[#allocation2 + $0x10] sm:$0xcc] %vm262, %v311
        %v314 = vld [vmem:[%s237] sm:$0xf]
        %316 = vst [vmem:[#allocation1] ss:$2 sm:$0xff] %v314
        %v317 = vld.sshfl [vmem:[#allocation1] sm:$0xff pattern:$0x75643120]
        %319 = vrot.lane.b32.xlu0 %v317, 96
        %v320 = vpop.permute.xlu0 %319
        %v321 = vrot.slane %v320, 4
        %vm322 = vcmask 785408
        %v323 = vsel %vm322, %v320, %v321
        %325 = vst.msk [vmem:[#allocation2 + $0x18] sm:$0x33] %vm246, %v323
        %v326 = vld [vmem:[%s237] sm:$0x3f]
        %s328 = scalar_lea.vmem [#allocation1], 1
        %329 = vst [vmem:[%s328] ss:$2 sm:$0xff] %v326
        %v330 = vld.sshfl [vmem:[#allocation1] sm:$0xff pattern:$0x75643120]
        %v332 = vld.sshfl [vmem:[#allocation1 + $0x8] sm:$0xff pattern:$0x75643120]
        %334 = vrot.lane.b32.xlu0 %v330, 95
        %v335 = vpop.permute.xlu0 %334
        %336 = vrot.lane.b32.xlu0 %v332, 95
        %v337 = vpop.permute.xlu0 %336
        %v338 = vrot.slane %v335, 4
        %v339 = vrot.slane %v337, 4
        %vm340 = vcmask 1043456
        %v341 = vsel %vm340, %v338, %v339
        %vm342 = vcmask 777216
        %v343 = vsel %vm342, %v335, %v341
        %345 = vst.msk [vmem:[#allocation2 + $0x18] sm:$0xcc] %vm262, %v343
        %v346 = vld [vmem:[%s237] sm:$0x3f]
        %348 = vst [vmem:[#allocation1] ss:$2 sm:$0xff] %v346
        %v349 = vld.sshfl [vmem:[#allocation1] sm:$0xff pattern:$0x75643120]
        %v351 = vld.sshfl [vmem:[#allocation1 + $0x8] sm:$0xff pattern:$0x75643120]
        %353 = vrot.lane.b32.xlu0 %v349, 94
        %v354 = vpop.permute.xlu0 %353
        %355 = vrot.lane.b32.xlu0 %v351, 94
        %v356 = vpop.permute.xlu0 %355
        %v357 = vrot.slane %v354, 4
        %v358 = vrot.slane %v356, 4
        %v359 = vsel %vm340, %v357, %v358
        %vm360 = vcmask 769024
        %v361 = vsel %vm360, %v354, %v359
        %363 = vst.msk [vmem:[#allocation2 + $0x20] sm:$0x33] %vm246, %v361
        %v364 = vld [vmem:[%s1] sm:$0xf]
        %v365 = vld [vmem:[#allocation2] sm:$0xff]
        %v366 = vld [vmem:[#allocation2 + $0x8] sm:$0xff]
        %v367 = vld [vmem:[#allocation2 + $0x10] sm:$0xff]
        %v368 = vld [vmem:[#allocation2 + $0x18] sm:$0xff]
        %v369 = vld [vmem:[#allocation2 + $0x20] sm:$0x33]
        %v370 = vld [vmem:[%s2] sm:$0xff]
        %372 = vset.pattern.permute.xlu0 0
        %373 = vperm.xlu0 %372, %v370
        %v374 = vpop.permute.xlu0 %373
        %v381 = vunpack.c.l.b16 %v365
        %v382 = vunpack.c.h.b16 %v365
        %v383 = vunpack.c.l.b16 %v366
        %v384 = vunpack.c.h.b16 %v366
        %v385 = vunpack.c.l.b16 %v367
        %v386 = vunpack.c.h.b16 %v367
        %v387 = vunpack.c.l.b16 %v368
        %v388 = vunpack.c.h.b16 %v368
        %v389 = vunpack.c.l.b16 %v369
        %v390 = vunpack.c.h.b16 %v369
        %v391 = vpack.c.b16 %v383, %v381
        %v392 = vpack.c.b16 %v384, %v382
        %v393 = vpack.c.b16 %v387, %v385
        %v394 = vpack.c.b16 %v388, %v386
        %v395 = vpack.c.b16 %v389, %v389
        %v396 = vpack.c.b16 %v390, %v390
        %vm401 = vcmask 293888
        %v403 = vsel %vm401, %v364, 0
        %v406 = vsel %vm244, %v395, 0
        %v409 = vsel %vm244, %v396, 0
        %411 = vmatpush.bf16.msra.mxu0 0
        %412 = vmatpush.bf16.msra.mxu0 0
        %413 = vmatpush.bf16.msra.mxu0 0
        %414 = vmatpush.bf16.msra.mxu0 0
        %415 = vmatpush.bf16.msra.mxu0 0
        %416 = vmatpush.bf16.msra.mxu0 %v406
        %417 = vmatpush.bf16.msra.mxu0 %v393
        %418 = vmatpush.bf16.msra.mxu0 %v391
        %419 = vmatmul.bf16.gmra.mxu0 %v403
        %v420 = vpop.f32.mrf.mxu0
        %v421 = vadd.f32 %v374, %v420
        %v422 = vpop.f32.mrf.mxu0
        %423 = vdwg.mxu0
        %424 = vmatpush.bf16.msra.mxu0 0
        %425 = vmatpush.bf16.msra.mxu0 0
        %426 = vmatpush.bf16.msra.mxu0 0
        %427 = vmatpush.bf16.msra.mxu0 0
        %428 = vmatpush.bf16.msra.mxu0 0
        %429 = vmatpush.bf16.msra.mxu0 %v409
        %430 = vmatpush.bf16.msra.mxu0 %v394
        %431 = vmatpush.bf16.msra.mxu0 %v392
        %432 = vmatmul.bf16.gmra.mxu0 %v403
        %v433 = vpop.f32.mrf.mxu0
        %v434 = vadd.f32 %v374, %v433
        %v435 = vpop.f32.mrf.mxu0
        %436 = vdwg.mxu0
        %v437 = vmax.f32 %v421, 0.0
        %v438 = vmax.f32 %v434, 0.0
        %v439 = vpack.c.bf16 %v438, %v437
        %vm440 = vcmask 1043456
        %vm441 = vcmask 785412
        %vm442 = vmor %vm441, %vm440
        %443 = vst.msk [vmem:[#allocation3] sm:$0xff] %vm442, %v439
        %vm444 = vcmask 913152
        %445 = vst.msk [vmem:[#allocation3 + $0x4] sm:$0xf] %vm444, 0
        %v446 = vld [vmem:[#allocation3] sm:$0xff]
        %vm447 = vcmask 523268
        %vm448 = vmor %vm447, %vm440
        %449 = vst.msk [vmem:[#allocation4] sm:$0xff] %vm448, %v446
        %v450 = vld [vmem:[#allocation3] sm:$0xff]
        %452 = vrot.lane.b32.xlu0 %v450, 127
        %v453 = vpop.permute.xlu0 %452
        %v454 = vrot.slane %v453, 4
        %v455 = vsel %vm257, %v453, %v454
        %457 = vst.msk [vmem:[#allocation4 + $0x8] sm:$0xff] %vm448, %v455
        %v458 = vld [vmem:[#allocation3] sm:$0xff]
        %460 = vrot.lane.b32.xlu0 %v458, 126
        %v461 = vpop.permute.xlu0 %460
        %v462 = vrot.slane %v461, 4
        %v463 = vsel %vm272, %v461, %v462
        %465 = vst.msk [vmem:[#allocation4 + $0x10] sm:$0xff] %vm448, %v463
        %v466 = vld [vmem:[#allocation3] sm:$0xff]
        %468 = vrot.lane.b32.xlu0 %v466, 112
        %v469 = vpop.permute.xlu0 %468
        %v470 = vrot.slane %v469, 4
        %v471 = vsel %vm285, %v469, %v470
        %473 = vst.msk [vmem:[#allocation4 + $0x18] sm:$0xff] %vm448, %v471
        %v474 = vld [vmem:[#allocation3] sm:$0xff]
        %476 = vrot.lane.b32.xlu0 %v474, 111
        %v477 = vpop.permute.xlu0 %476
        %v478 = vrot.slane %v477, 4
        %v479 = vsel %vm297, %v477, %v478
        %481 = vst.msk [vmem:[#allocation4 + $0x20] sm:$0xff] %vm448, %v479
        %v482 = vld [vmem:[#allocation3] sm:$0xff]
        %484 = vrot.lane.b32.xlu0 %v482, 110
        %v485 = vpop.permute.xlu0 %484
        %v486 = vrot.slane %v485, 4
        %v487 = vsel %vm310, %v485, %v486
        %489 = vst.msk [vmem:[#allocation4 + $0x28] sm:$0xff] %vm448, %v487
        %v490 = vld [vmem:[#allocation3] sm:$0xff]
        %492 = vrot.lane.b32.xlu0 %v490, 96
        %v493 = vpop.permute.xlu0 %492
        %v494 = vrot.slane %v493, 4
        %v495 = vsel %vm322, %v493, %v494
        %497 = vst.msk [vmem:[#allocation4 + $0x30] sm:$0xff] %vm448, %v495
        %v498 = vld [vmem:[#allocation3] sm:$0xff]
        %500 = vrot.lane.b32.xlu0 %v498, 95
        %v501 = vpop.permute.xlu0 %500
        %v502 = vrot.slane %v501, 4
        %v503 = vsel %vm342, %v501, %v502
        %505 = vst.msk [vmem:[#allocation4 + $0x38] sm:$0xff] %vm448, %v503
        %v506 = vld [vmem:[#allocation3] sm:$0xff]
        %508 = vrot.lane.b32.xlu0 %v506, 94
        %v509 = vpop.permute.xlu0 %508
        %v510 = vrot.slane %v509, 4
        %v511 = vsel %vm360, %v509, %v510
        %513 = vst.msk [vmem:[#allocation4 + $0x40] sm:$0xff] %vm448, %v511
        %v514 = vld [vmem:[#allocation5] sm:$0xf]
        %v515 = vld [vmem:[#allocation4] sm:$0xff]
        %v516 = vld [vmem:[#allocation4 + $0x8] sm:$0xff]
        %v517 = vld [vmem:[#allocation4 + $0x10] sm:$0xff]
        %v518 = vld [vmem:[#allocation4 + $0x18] sm:$0xff]
        %v519 = vld [vmem:[#allocation4 + $0x20] sm:$0xff]
        %v520 = vld [vmem:[#allocation4 + $0x28] sm:$0xff]
        %v521 = vld [vmem:[#allocation4 + $0x30] sm:$0xff]
        %v522 = vld [vmem:[#allocation4 + $0x38] sm:$0xff]
        %v523 = vld [vmem:[#allocation4 + $0x40] sm:$0xff]
        %v524 = vld [vmem:[%s4] sm:$0xff]
        %526 = vset.pattern.permute.xlu0 0
        %527 = vperm.xlu0 %526, %v524
        %v528 = vpop.permute.xlu0 %527
        %v539 = vunpack.c.l.b16 %v515
        %v540 = vunpack.c.h.b16 %v515
        %v541 = vunpack.c.l.b16 %v516
        %v542 = vunpack.c.h.b16 %v516
        %v543 = vunpack.c.l.b16 %v517
        %v544 = vunpack.c.h.b16 %v517
        %v545 = vunpack.c.l.b16 %v518
        %v546 = vunpack.c.h.b16 %v518
        %v547 = vunpack.c.l.b16 %v519
        %v548 = vunpack.c.h.b16 %v519
        %v549 = vunpack.c.l.b16 %v520
        %v550 = vunpack.c.h.b16 %v520
        %v551 = vunpack.c.l.b16 %v521
        %v552 = vunpack.c.h.b16 %v521
        %v553 = vunpack.c.l.b16 %v522
        %v554 = vunpack.c.h.b16 %v522
        %v555 = vunpack.c.l.b16 %v523
        %v556 = vunpack.c.h.b16 %v523
        %v557 = vpack.c.b16 %v541, %v539
        %v558 = vpack.c.b16 %v542, %v540
        %v559 = vpack.c.b16 %v545, %v543
        %v560 = vpack.c.b16 %v546, %v544
        %v561 = vpack.c.b16 %v549, %v547
        %v562 = vpack.c.b16 %v550, %v548
        %v563 = vpack.c.b16 %v553, %v551
        %v564 = vpack.c.b16 %v554, %v552
        %v565 = vpack.c.b16 %v555, %v555
        %v566 = vpack.c.b16 %v556, %v556
        %vm575 = vcmask 588800
        %v577 = vsel %vm575, %v514, 0
        %v580 = vsel %vm440, %v565, 0
        %v583 = vsel %vm440, %v566, 0
        %585 = vmatpush.bf16.msra.mxu0 0
        %586 = vmatpush.bf16.msra.mxu0 0
        %587 = vmatpush.bf16.msra.mxu0 0
        %588 = vmatpush.bf16.msra.mxu0 %v580
        %589 = vmatpush.bf16.msra.mxu0 %v563
        %590 = vmatpush.bf16.msra.mxu0 %v561
        %591 = vmatpush.bf16.msra.mxu0 %v559
        %592 = vmatpush.bf16.msra.mxu0 %v557
        %593 = vmatmul.bf16.gmra.mxu0 %v577
        %v594 = vpop.f32.mrf.mxu0
        %v595 = vadd.f32 %v528, %v594
        %v596 = vpop.f32.mrf.mxu0
        %597 = vdwg.mxu0
        %598 = vmatpush.bf16.msra.mxu0 0
        %599 = vmatpush.bf16.msra.mxu0 0
        %600 = vmatpush.bf16.msra.mxu0 0
        %601 = vmatpush.bf16.msra.mxu0 %v583
        %602 = vmatpush.bf16.msra.mxu0 %v564
        %603 = vmatpush.bf16.msra.mxu0 %v562
        %604 = vmatpush.bf16.msra.mxu0 %v560
        %605 = vmatpush.bf16.msra.mxu0 %v558
        %606 = vmatmul.bf16.gmra.mxu0 %v577
        %v607 = vpop.f32.mrf.mxu0
        %v608 = vadd.f32 %v528, %v607
        %v609 = vpop.f32.mrf.mxu0
        %610 = vdwg.mxu0
        %v611 = vmax.f32 %v595, 0.0
        %v612 = vmax.f32 %v608, 0.0
        %613 = vst [vmem:[%s232] sm:$0xff] %v611
        %vm614 = vcmask 523264
        %615 = vst.msk [vmem:[%s232 + $0x8] sm:$0xff] %vm614, %v612
        %s616 = sand.u32 %s138, 1
        %s617 = scalar_lea.sflag [#allocation7], %s616
        %s618 = sand.u32 %s138, 1
        %s619 = smul.addr %s618, 16
        %s620 = scalar_lea.vmem [#allocation8], %s619
        // Predicated region
        $region45: #{tpu_custom_call.1} parent=39 // pred_check
          %p621 = pneg %p148
        $region46: #{tpu_custom_call.1} parent=39 // pred_check_branch
          %623 = sbr.rel (%p621) target = $region48
        $region47: #{tpu_custom_call.1} parent=39 // pred_region
          %625 = vsyncadd %s617, 0
          %s626 = smul.addr %s20, 2
          %s627 = smul.addr %s626, 8
          %s628 = scalar_lea.hbm %s5, %s627
          %s630 = sshll.u32 %s620, 4
          %s631 = int_to_ptr.vmem [resolvable:$true] %s630
          %s632 = sshll.u32 %s628, 4
          %s633 = int_to_ptr.hbm [resolvable:$true] %s632
          %635 = dma.vmem_to_hbm [thread:$0]  %s631, 256, %s633, %s617
        $region48: #{tpu_custom_call.1} parent=39 // pred_fallthru
          _
      $region40: #{tpu_custom_call.1} parent=5 // pred_fallthru
        _
      %p636 = scmp.le.s32.totalorder 2, %s15
      // Predicated region
      $region49: #{tpu_custom_call.1} parent=5 // pred_check
        %p637 = pneg %p636
      $region50: #{tpu_custom_call.1} parent=5 // pred_check_branch
        %639 = sbr.rel (%p637) target = $region52
      $region51: #{tpu_custom_call.1} parent=5 // pred_region
        %s640 = ssub.s32 %s15, 2
        // Predicated region
        $region53: #{tpu_custom_call.1} parent=51 // pred_check
          %p641 = pneg %p154
        $region54: #{tpu_custom_call.1} parent=51 // pred_check_branch
          %643 = sbr.rel (%p641) target = $region56
        $region55: #{tpu_custom_call.1} parent=51 // pred_region
          %s644 = sand.u32 %s139, 1
          %s645 = scalar_lea.sflag [#allocation7], %s644
          %s646 = sand.u32 %s139, 1
          %s647 = smul.addr %s646, 16
          %s648 = scalar_lea.vmem [#allocation8], %s647
          %650 = dma.done %s645, 256
        $region56: #{tpu_custom_call.1} parent=51 // pred_fallthru
          _
      $region52: #{tpu_custom_call.1} parent=5 // pred_fallthru
        _
    $region6: #{tpu_custom_call.1} parent=1 // loop_footer
      %s19 = sadd.s32 1, %s15
    $region7: #{tpu_custom_call.1} parent=1 // loop_footer_branch
      %14 = sbr.rel target = $region3
    $region8: #{tpu_custom_call.1} parent=1 // loop_exit
      _
    %651 = vsyncpa [#allocation6], 1
    %s652 = scalar_lea.sflag [#allocation6], 1
    %653 = vsyncpa %s652, 1
    %654 = vsyncpa [#allocation7], 1
    %s655 = scalar_lea.sflag [#allocation7], 1
    %656 = vsyncpa %s655, 1

</llo_original>
